<compile_context>
chip_gen: v6e
topology: v6e:2x2x1
jax: 0.10.0
libtpu: 0.0.40
codegen_flags: <defaults>
</compile_context>

<pallas_src>
import jax
import jax.numpy as jnp
from jax.experimental import pallas as pl
from jax.experimental.pallas import tpu as pltpu

EPS = 1e-5  # torch.nn.LayerNorm default
_MIB = 1024 * 1024


def _patch_expand_kernel(x_ref, w_ref, g_ref, b_ref, o_ref):
    # x_ref : (TM, C)           input pixels (TM = TH*W rows)
    # w_ref : (2, C, 2*C2)      Linear weight, pre-split into the two p1 slabs
    # g_ref : (1, 2*C2)         LayerNorm gamma tiled over the two p2 groups
    # b_ref : (1, 2*C2)         LayerNorm beta  tiled over the two p2 groups
    # o_ref : (TH, 2, W, 2*C2)  output block; axis 1 is p1, last axis is (p2, c)
    th, _, w_pix, two_c2 = o_ref.shape
    c2 = two_c2 // 2
    aligned = (c2 % 128) == 0  # static -> selects one codegen path

    x = x_ref[...]
    gamma = g_ref[...].astype(jnp.float32)
    beta = b_ref[...].astype(jnp.float32)
    inv_c2 = jnp.float32(1.0 / c2)

    if not aligned:
        # Group-0 (p2 == 0) lane mask; avoids any unaligned lane slicing.
        lane = jax.lax.broadcasted_iota(jnp.int32, (1, two_c2), 1)
        mask0 = lane < c2

    for p1 in range(2):  # static unroll over the two p1 slabs
        # MXU: (TM, C) @ (C, 2*C2), f32 accumulation, operands in input dtype.
        y = jnp.dot(x, w_ref[p1], preferred_element_type=jnp.float32)

        if aligned:
            # p2 groups are aligned 128-multiple lane halves: sliced
            # reductions with narrow (TM, 1) stats, rsqrt on EUP, and two
            # lane-aligned stores (offsets 0 and C2).
            g_half = gamma[:, :c2]
            b_half = beta[:, :c2]
            for p2 in range(2):
                yh = y[:, p2 * c2:(p2 + 1) * c2]
                mu = jnp.sum(yh, axis=-1, keepdims=True) * inv_c2
                centered = yh - mu
                var = jnp.sum(centered * centered, axis=-1, keepdims=True) * inv_c2
                inv = jax.lax.rsqrt(var + EPS)                       # (TM, 1)
                yn = centered * inv * g_half + b_half
                o_ref[:, p1, :, p2 * c2:(p2 + 1) * c2] = (
                    yn.reshape(th, w_pix, c2).astype(o_ref.dtype))
        else:
            # Unaligned fallback: full-width masked reductions.
            s0 = jnp.sum(jnp.where(mask0, y, 0.0), axis=-1, keepdims=True)
            st = jnp.sum(y, axis=-1, keepdims=True)
            mu = jnp.where(mask0, s0, st - s0) * inv_c2              # (TM, 2*C2)

            centered = y - mu                                        # reused
            csq = centered * centered
            v0 = jnp.sum(jnp.where(mask0, csq, 0.0), axis=-1, keepdims=True) * inv_c2
            # Direct masked sum for group 1 (not vt - v0): cannot go negative.
            v1 = jnp.sum(jnp.where(mask0, 0.0, csq), axis=-1, keepdims=True) * inv_c2
            inv = jnp.where(mask0, jax.lax.rsqrt(v0 + EPS), jax.lax.rsqrt(v1 + EPS))

            yn = centered * inv * gamma + beta
            # Single full-lane-width store for this p1 slab.
            # TODO(synk): for shallow stages (2*C2 < 128) a lane-dense store
            # would need a (TM, 2*C2)->(TH, W*2*C2) value fold, which Mosaic
            # shape-cast does not reliably support; kept as masked stores.
            o_ref[:, p1, :, :] = yn.reshape(th, w_pix, two_c2).astype(o_ref.dtype)


def _vmem_capacity_bytes():
    try:
        info = pltpu.get_tpu_info()
        cap = getattr(info, "vmem_capacity_bytes", None)
        if cap:
            return int(cap)
    except Exception:
        pass
    return 64 * _MIB  # v7x floor -> safe on every generation


def _tile_need_bytes(tm, C, io_itemsize, w_bytes):
    """Per-step VMEM footprint estimate for a (TM, C) strip."""
    io = (2 * tm * C * io_itemsize          # input tile, double-buffered
          + 2 * 2 * tm * C * io_itemsize)   # output tile (2*TM*C elems), x2
    params = 2 * w_bytes + 2 * (4 * C * 4)  # weight + gamma/beta, x2 buffers
    # ~7 live (TM, 2*C2)=(TM, C) f32 temps per slab:
    # y, mu, centered, csq, 2 masked temps, inv/yn.
    interm = 7 * tm * C * 4
    return io + params + interm


def _choose_strip_rows(BH, W, C, io_itemsize, w_bytes, budget, max_rows):
    """Pick TH = (b, h) rows per grid step.

    Hard constraints: TH divides B*H and TM = TH*W is a multiple of 8
    (the (8,128) block rule for the (TM, C) input block), unless TH == B*H
    (full-extent block).  Preference among budget-fitting candidates:
    even grid-step count (v7x megacore split), then largest tile.
    """
    candidates = []
    for th in range(1, BH + 1):
        if BH % th:
            continue
        tm = th * W
        if tm % 8 != 0 and th != BH:
            continue
        if tm > max_rows:
            continue
        candidates.append((th, tm, BH // th, _tile_need_bytes(tm, C, io_itemsize, w_bytes)))

    fitting = [c for c in candidates if c[3] <= budget]
    if fitting:
        th, _, _, need = max(fitting, key=lambda c: (c[2] % 2 == 0, c[1]))
        return th, need
    if candidates:
        # Nothing fits the budget: smallest aligned tile; the raised
        # vmem_limit gives it the best chance to compile.
        th, _, _, need = min(candidates, key=lambda c: c[1])
        return th, need
    # No divisor of B*H yields an 8-aligned TM: one full-array block.
    return BH, _tile_need_bytes(BH * W, C, io_itemsize, w_bytes)


def patch_expanding(x, weight, gamma, beta):
    """PatchExpanding forward.

    x      : (B, H, W, dim)
    weight : (2*dim, dim)  -- nn.Linear(dim, 2*dim, bias=False).weight layout
    gamma  : (dim // 2,)   -- LayerNorm weight
    beta   : (dim // 2,)   -- LayerNorm bias
    returns (B, 2H, 2W, dim // 2)
    """
    B, H, W, C = x.shape
    assert C % 2 == 0, "dim must be even"
    C2 = C // 2
    BH = B * H
    N = BH * W

    # Host-side prep touches only the (small) parameters.
    # weight.T is (C, 2C) with out-feature order (p1, p2, c); split the two
    # p1 slabs so each slab's matmul output starts at lane 0.
    w3 = weight.T.reshape(C, 2, 2 * C2).transpose(1, 0, 2)      # (2, C, 2*C2)
    g2 = jnp.concatenate([gamma, gamma]).reshape(1, 2 * C2)
    b2 = jnp.concatenate([beta, beta]).reshape(1, 2 * C2)
    x_rows = x.reshape(N, C)

    io_itemsize = x.dtype.itemsize
    w_bytes = w3.size * w3.dtype.itemsize

    vmem_cap = _vmem_capacity_bytes()
    if vmem_cap <= 64 * _MIB:        # v7x-class: 64 MiB per TensorCore
        budget, max_rows = int(0.40 * vmem_cap), 2048
    else:                            # v5e / v6e: 128 MiB per TensorCore
        budget, max_rows = int(0.55 * vmem_cap), 8192

    TH, _ = _choose_strip_rows(BH, W, C, io_itemsize, w_bytes, budget, max_rows)
    TM = TH * W
    grid = (BH // TH,)
    vmem_limit = int(vmem_cap - 8 * _MIB)   # leave Mosaic internal headroom

    out4 = pl.pallas_call(
        _patch_expand_kernel,
        out_shape=jax.ShapeDtypeStruct((BH, 2, W, 2 * C2), x.dtype),
        grid_spec=pltpu.PrefetchScalarGridSpec(
            num_scalar_prefetch=0,
            grid=grid,
            in_specs=[
                pl.BlockSpec((TM, C), lambda i: (i, 0)),            # pixel rows
                pl.BlockSpec((2, C, 2 * C2), lambda i: (0, 0, 0)),  # weight slabs
                pl.BlockSpec((1, 2 * C2), lambda i: (0, 0)),        # gamma (x2)
                pl.BlockSpec((1, 2 * C2), lambda i: (0, 0)),        # beta  (x2)
            ],
            out_specs=pl.BlockSpec((TH, 2, W, 2 * C2), lambda i: (i, 0, 0, 0)),
        ),
        compiler_params=pltpu.CompilerParams(
            dimension_semantics=("parallel",),
            vmem_limit_bytes=vmem_limit,
        ),
    )(x_rows, w3, g2, b2)

    # (BH, 2, W, 2*C2) is already in [b, h, p1, w, p2, c] order -> pure reshape.
    return out4.reshape(B, 2 * H, 2 * W, C2)


def _reference(x, weight, gamma, beta):
    B, H, W, C = x.shape
    C2 = C // 2
    y = jnp.einsum("bhwc,oc->bhwo", x.astype(jnp.float32),
                   weight.astype(jnp.float32))                 # Linear, no bias
    y = y.reshape(B, H, W, 2, 2, C2).transpose(0, 1, 3, 2, 4, 5)
    y = y.reshape(B, 2 * H, 2 * W, C2)
    mu = jnp.mean(y, axis=-1, keepdims=True)
    var = jnp.mean(jnp.square(y - mu), axis=-1, keepdims=True)
    yn = (y - mu) * jax.lax.rsqrt(var + EPS)
    return yn * gamma + beta


def _run_case(key, B, H, W, dim):
    k1, k2, k3, k4 = jax.random.split(key, 4)
    x = jax.random.normal(k1, (B, H, W, dim), dtype=jnp.float32)
    # nn.Linear(dim, 2*dim, bias=False): weight shape (2*dim, dim)
    weight = jax.random.normal(k2, (2 * dim, dim), dtype=jnp.float32) * 0.05
    gamma = 1.0 + 0.1 * jax.random.normal(k3, (dim // 2,), dtype=jnp.float32)
    beta = 0.1 * jax.random.normal(k4, (dim // 2,), dtype=jnp.float32)

    out = jax.block_until_ready(patch_expanding(x, weight, gamma, beta))
    ref = _reference(x, weight, gamma, beta)
    assert out.shape == (B, 2 * H, 2 * W, dim // 2), out.shape
    err = float(jnp.max(jnp.abs(out - ref)))
    assert jnp.allclose(out, ref, atol=1e-4, rtol=1e-4), err


if __name__ == "__main__":
    key = jax.random.PRNGKey(0)
    k_a, k_b = jax.random.split(key)

    # Small shapes consistent with forward(); exercises the masked-LN path
    # (2*C2 = 32 lanes) and a 2-step parallel grid.
    _run_case(k_a, B=2, H=8, W=8, dim=32)
    # Exercises the aligned-lane LN path (C2 = 128) and the even-step picker.
    _run_case(k_b, B=1, H=2, W=8, dim=256)

    print("KERNEL_OK")
</pallas_src>

<mosaic_0001>
module attributes {stable_mosaic.version = 11 : i64} {
  func.func @_patch_expand_kernel(%arg0: i32, %arg1: memref<64x32xf32, #tpu.memory_space<vmem>>, %arg2: memref<2x32x32xf32, #tpu.memory_space<vmem>>, %arg3: memref<1x32xf32, #tpu.memory_space<vmem>>, %arg4: memref<1x32xf32, #tpu.memory_space<vmem>>, %arg5: memref<8x2x8x32xf32, #tpu.memory_space<vmem>>) attributes {dimension_semantics = [#tpu.dimension_semantics<parallel>], iteration_bounds = array<i64: 2>, scalar_prefetch = 0 : i64, scratch_operands = 0 : i64, tpu.core_type = #tpu.core_type<tc>, window_params = [{transform_indices = @transform_0, window_bounds = array<i64: 64, 32>}, {pipeline_mode = #tpu.pipeline_mode<synchronous>, transform_indices = @transform_1, window_bounds = array<i64: 2, 32, 32>}, {pipeline_mode = #tpu.pipeline_mode<synchronous>, transform_indices = @transform_2, window_bounds = array<i64: 1, 32>}, {pipeline_mode = #tpu.pipeline_mode<synchronous>, transform_indices = @transform_3, window_bounds = array<i64: 1, 32>}, {transform_indices = @transform_4, window_bounds = array<i64: 8, 2, 8, 32>}]} {
    %c0 = arith.constant 0 : index
    %c0_0 = arith.constant 0 : index
    %0 = vector.load %arg1[%c0, %c0_0] : memref<64x32xf32, #tpu.memory_space<vmem>>, vector<64x32xf32>
    %c0_1 = arith.constant 0 : index
    %c0_2 = arith.constant 0 : index
    %1 = vector.load %arg3[%c0_1, %c0_2] : memref<1x32xf32, #tpu.memory_space<vmem>>, vector<1x32xf32>
    %c0_3 = arith.constant 0 : index
    %c0_4 = arith.constant 0 : index
    %2 = vector.load %arg4[%c0_3, %c0_4] : memref<1x32xf32, #tpu.memory_space<vmem>>, vector<1x32xf32>
    %3 = tpu.iota {dimensions = array<i32: 1>} : vector<1x32xi32>
    %c16_i32 = arith.constant 16 : i32
    %4 = vector.broadcast %c16_i32 : i32 to vector<1x32xi32>
    %5 = arith.cmpi slt, %3, %4 : vector<1x32xi32>
    %c0_5 = arith.constant 0 : index
    %c0_6 = arith.constant 0 : index
    %c0_7 = arith.constant 0 : index
    %6 = vector.load %arg2[%c0_5, %c0_6, %c0_7] : memref<2x32x32xf32, #tpu.memory_space<vmem>>, vector<1x32x32xf32>
    %7 = vector.shape_cast %6 : vector<1x32x32xf32> to vector<32x32xf32>
    %cst = arith.constant dense<0.000000e+00> : vector<64x32xf32>
    %8 = tpu.matmul %0, %7, %cst {dimension_numbers = #tpu.dot_dimension_numbers<[1], [0], [0], [1], [0, 0, 1, 1], [], []>} : vector<64x32xf32>, vector<32x32xf32>, vector<64x32xf32> -> vector<64x32xf32>
    %cst_8 = arith.constant 0.000000e+00 : f32
    %9 = vector.shape_cast %5 : vector<1x32xi1> to vector<1x32xi1>
    %10 = vector.broadcast %9 : vector<1x32xi1> to vector<64x32xi1>
    %11 = vector.broadcast %cst_8 : f32 to vector<64x32xf32>
    %12 = arith.select %10, %8, %11 : vector<64x32xi1>, vector<64x32xf32>
    %cst_9 = arith.constant dense<0.000000e+00> : vector<64xf32>
    %13 = vector.multi_reduction <add>, %12, %cst_9 [1] : vector<64x32xf32> to vector<64xf32>
    %14 = vector.shape_cast %13 : vector<64xf32> to vector<64x1xf32>
    %cst_10 = arith.constant dense<0.000000e+00> : vector<64xf32>
    %15 = vector.multi_reduction <add>, %8, %cst_10 [1] : vector<64x32xf32> to vector<64xf32>
    %16 = vector.shape_cast %15 : vector<64xf32> to vector<64x1xf32>
    %17 = arith.subf %16, %14 : vector<64x1xf32>
    %18 = vector.shape_cast %5 : vector<1x32xi1> to vector<1x32xi1>
    %19 = vector.broadcast %18 : vector<1x32xi1> to vector<64x32xi1>
    %20 = vector.shape_cast %14 : vector<64x1xf32> to vector<64x1xf32>
    %21 = vector.broadcast %20 : vector<64x1xf32> to vector<64x32xf32>
    %22 = vector.shape_cast %17 : vector<64x1xf32> to vector<64x1xf32>
    %23 = vector.broadcast %22 : vector<64x1xf32> to vector<64x32xf32>
    %24 = arith.select %19, %21, %23 : vector<64x32xi1>, vector<64x32xf32>
    %cst_11 = arith.constant 6.250000e-02 : f32
    %25 = vector.broadcast %cst_11 : f32 to vector<64x32xf32>
    %26 = arith.mulf %24, %25 : vector<64x32xf32>
    %27 = arith.subf %8, %26 : vector<64x32xf32>
    %28 = arith.mulf %27, %27 : vector<64x32xf32>
    %cst_12 = arith.constant 0.000000e+00 : f32
    %29 = vector.shape_cast %5 : vector<1x32xi1> to vector<1x32xi1>
    %30 = vector.broadcast %29 : vector<1x32xi1> to vector<64x32xi1>
    %31 = vector.broadcast %cst_12 : f32 to vector<64x32xf32>
    %32 = arith.select %30, %28, %31 : vector<64x32xi1>, vector<64x32xf32>
    %cst_13 = arith.constant dense<0.000000e+00> : vector<64xf32>
    %33 = vector.multi_reduction <add>, %32, %cst_13 [1] : vector<64x32xf32> to vector<64xf32>
    %34 = vector.shape_cast %33 : vector<64xf32> to vector<64x1xf32>
    %cst_14 = arith.constant 6.250000e-02 : f32
    %35 = vector.broadcast %cst_14 : f32 to vector<64x1xf32>
    %36 = arith.mulf %34, %35 : vector<64x1xf32>
    %cst_15 = arith.constant 0.000000e+00 : f32
    %37 = vector.shape_cast %5 : vector<1x32xi1> to vector<1x32xi1>
    %38 = vector.broadcast %37 : vector<1x32xi1> to vector<64x32xi1>
    %39 = vector.broadcast %cst_15 : f32 to vector<64x32xf32>
    %40 = arith.select %38, %39, %28 : vector<64x32xi1>, vector<64x32xf32>
    %cst_16 = arith.constant dense<0.000000e+00> : vector<64xf32>
    %41 = vector.multi_reduction <add>, %40, %cst_16 [1] : vector<64x32xf32> to vector<64xf32>
    %42 = vector.shape_cast %41 : vector<64xf32> to vector<64x1xf32>
    %cst_17 = arith.constant 6.250000e-02 : f32
    %43 = vector.broadcast %cst_17 : f32 to vector<64x1xf32>
    %44 = arith.mulf %42, %43 : vector<64x1xf32>
    %cst_18 = arith.constant 9.99999974E-6 : f32
    %45 = vector.broadcast %cst_18 : f32 to vector<64x1xf32>
    %46 = arith.addf %36, %45 : vector<64x1xf32>
    %47 = math.rsqrt %46 : vector<64x1xf32>
    %cst_19 = arith.constant 9.99999974E-6 : f32
    %48 = vector.broadcast %cst_19 : f32 to vector<64x1xf32>
    %49 = arith.addf %44, %48 : vector<64x1xf32>
    %50 = math.rsqrt %49 : vector<64x1xf32>
    %51 = vector.shape_cast %5 : vector<1x32xi1> to vector<1x32xi1>
    %52 = vector.broadcast %51 : vector<1x32xi1> to vector<64x32xi1>
    %53 = vector.shape_cast %47 : vector<64x1xf32> to vector<64x1xf32>
    %54 = vector.broadcast %53 : vector<64x1xf32> to vector<64x32xf32>
    %55 = vector.shape_cast %50 : vector<64x1xf32> to vector<64x1xf32>
    %56 = vector.broadcast %55 : vector<64x1xf32> to vector<64x32xf32>
    %57 = arith.select %52, %54, %56 : vector<64x32xi1>, vector<64x32xf32>
    %58 = arith.mulf %27, %57 : vector<64x32xf32>
    %59 = vector.broadcast %1 : vector<1x32xf32> to vector<64x32xf32>
    %60 = arith.mulf %58, %59 : vector<64x32xf32>
    %61 = vector.broadcast %2 : vector<1x32xf32> to vector<64x32xf32>
    %62 = arith.addf %60, %61 : vector<64x32xf32>
    %63 = vector.shape_cast %62 : vector<64x32xf32> to vector<8x8x32xf32>
    %c0_20 = arith.constant 0 : index
    %c0_21 = arith.constant 0 : index
    %c0_22 = arith.constant 0 : index
    %c0_23 = arith.constant 0 : index
    %64 = vector.load %arg5[%c0_20, %c0_21, %c0_22, %c0_23] : memref<8x2x8x32xf32, #tpu.memory_space<vmem>>, vector<8x1x8x32xf32>
    %65 = vector.shape_cast %64 : vector<8x1x8x32xf32> to vector<8x8x32xf32>
    %66 = vector.shape_cast %63 : vector<8x8x32xf32> to vector<8x1x8x32xf32>
    tpu.vector_store %arg5[%c0_20, %c0_21, %c0_22, %c0_23], %66 {strides = array<i32>} : memref<8x2x8x32xf32, #tpu.memory_space<vmem>>, vector<8x1x8x32xf32>,
    %c1 = arith.constant 1 : index
    %c0_24 = arith.constant 0 : index
    %c0_25 = arith.constant 0 : index
    %67 = vector.load %arg2[%c1, %c0_24, %c0_25] : memref<2x32x32xf32, #tpu.memory_space<vmem>>, vector<1x32x32xf32>
    %68 = vector.shape_cast %67 : vector<1x32x32xf32> to vector<32x32xf32>
    %cst_26 = arith.constant dense<0.000000e+00> : vector<64x32xf32>
    %69 = tpu.matmul %0, %68, %cst_26 {dimension_numbers = #tpu.dot_dimension_numbers<[1], [0], [0], [1], [0, 0, 1, 1], [], []>} : vector<64x32xf32>, vector<32x32xf32>, vector<64x32xf32> -> vector<64x32xf32>
    %cst_27 = arith.constant 0.000000e+00 : f32
    %70 = vector.shape_cast %5 : vector<1x32xi1> to vector<1x32xi1>
    %71 = vector.broadcast %70 : vector<1x32xi1> to vector<64x32xi1>
    %72 = vector.broadcast %cst_27 : f32 to vector<64x32xf32>
    %73 = arith.select %71, %69, %72 : vector<64x32xi1>, vector<64x32xf32>
    %cst_28 = arith.constant dense<0.000000e+00> : vector<64xf32>
    %74 = vector.multi_reduction <add>, %73, %cst_28 [1] : vector<64x32xf32> to vector<64xf32>
    %75 = vector.shape_cast %74 : vector<64xf32> to vector<64x1xf32>
    %cst_29 = arith.constant dense<0.000000e+00> : vector<64xf32>
    %76 = vector.multi_reduction <add>, %69, %cst_29 [1] : vector<64x32xf32> to vector<64xf32>
    %77 = vector.shape_cast %76 : vector<64xf32> to vector<64x1xf32>
    %78 = arith.subf %77, %75 : vector<64x1xf32>
    %79 = vector.shape_cast %5 : vector<1x32xi1> to vector<1x32xi1>
    %80 = vector.broadcast %79 : vector<1x32xi1> to vector<64x32xi1>
    %81 = vector.shape_cast %75 : vector<64x1xf32> to vector<64x1xf32>
    %82 = vector.broadcast %81 : vector<64x1xf32> to vector<64x32xf32>
    %83 = vector.shape_cast %78 : vector<64x1xf32> to vector<64x1xf32>
    %84 = vector.broadcast %83 : vector<64x1xf32> to vector<64x32xf32>
    %85 = arith.select %80, %82, %84 : vector<64x32xi1>, vector<64x32xf32>
    %cst_30 = arith.constant 6.250000e-02 : f32
    %86 = vector.broadcast %cst_30 : f32 to vector<64x32xf32>
    %87 = arith.mulf %85, %86 : vector<64x32xf32>
    %88 = arith.subf %69, %87 : vector<64x32xf32>
    %89 = arith.mulf %88, %88 : vector<64x32xf32>
    %cst_31 = arith.constant 0.000000e+00 : f32
    %90 = vector.shape_cast %5 : vector<1x32xi1> to vector<1x32xi1>
    %91 = vector.broadcast %90 : vector<1x32xi1> to vector<64x32xi1>
    %92 = vector.broadcast %cst_31 : f32 to vector<64x32xf32>
    %93 = arith.select %91, %89, %92 : vector<64x32xi1>, vector<64x32xf32>
    %cst_32 = arith.constant dense<0.000000e+00> : vector<64xf32>
    %94 = vector.multi_reduction <add>, %93, %cst_32 [1] : vector<64x32xf32> to vector<64xf32>
    %95 = vector.shape_cast %94 : vector<64xf32> to vector<64x1xf32>
    %cst_33 = arith.constant 6.250000e-02 : f32
    %96 = vector.broadcast %cst_33 : f32 to vector<64x1xf32>
    %97 = arith.mulf %95, %96 : vector<64x1xf32>
    %cst_34 = arith.constant 0.000000e+00 : f32
    %98 = vector.shape_cast %5 : vector<1x32xi1> to vector<1x32xi1>
    %99 = vector.broadcast %98 : vector<1x32xi1> to vector<64x32xi1>
    %100 = vector.broadcast %cst_34 : f32 to vector<64x32xf32>
    %101 = arith.select %99, %100, %89 : vector<64x32xi1>, vector<64x32xf32>
    %cst_35 = arith.constant dense<0.000000e+00> : vector<64xf32>
    %102 = vector.multi_reduction <add>, %101, %cst_35 [1] : vector<64x32xf32> to vector<64xf32>
    %103 = vector.shape_cast %102 : vector<64xf32> to vector<64x1xf32>
    %cst_36 = arith.constant 6.250000e-02 : f32
    %104 = vector.broadcast %cst_36 : f32 to vector<64x1xf32>
    %105 = arith.mulf %103, %104 : vector<64x1xf32>
    %cst_37 = arith.constant 9.99999974E-6 : f32
    %106 = vector.broadcast %cst_37 : f32 to vector<64x1xf32>
    %107 = arith.addf %97, %106 : vector<64x1xf32>
    %108 = math.rsqrt %107 : vector<64x1xf32>
    %cst_38 = arith.constant 9.99999974E-6 : f32
    %109 = vector.broadcast %cst_38 : f32 to vector<64x1xf32>
    %110 = arith.addf %105, %109 : vector<64x1xf32>
    %111 = math.rsqrt %110 : vector<64x1xf32>
    %112 = vector.shape_cast %5 : vector<1x32xi1> to vector<1x32xi1>
    %113 = vector.broadcast %112 : vector<1x32xi1> to vector<64x32xi1>
    %114 = vector.shape_cast %108 : vector<64x1xf32> to vector<64x1xf32>
    %115 = vector.broadcast %114 : vector<64x1xf32> to vector<64x32xf32>
    %116 = vector.shape_cast %111 : vector<64x1xf32> to vector<64x1xf32>
    %117 = vector.broadcast %116 : vector<64x1xf32> to vector<64x32xf32>
    %118 = arith.select %113, %115, %117 : vector<64x32xi1>, vector<64x32xf32>
    %119 = arith.mulf %88, %118 : vector<64x32xf32>
    %120 = vector.broadcast %1 : vector<1x32xf32> to vector<64x32xf32>
    %121 = arith.mulf %119, %120 : vector<64x32xf32>
    %122 = vector.broadcast %2 : vector<1x32xf32> to vector<64x32xf32>
    %123 = arith.addf %121, %122 : vector<64x32xf32>
    %124 = vector.shape_cast %123 : vector<64x32xf32> to vector<8x8x32xf32>
    %c0_39 = arith.constant 0 : index
    %c1_40 = arith.constant 1 : index
    %c0_41 = arith.constant 0 : index
    %c0_42 = arith.constant 0 : index
    %125 = vector.load %arg5[%c0_39, %c1_40, %c0_41, %c0_42] : memref<8x2x8x32xf32, #tpu.memory_space<vmem>>, vector<8x1x8x32xf32>
    %126 = vector.shape_cast %125 : vector<8x1x8x32xf32> to vector<8x8x32xf32>
    %127 = vector.shape_cast %124 : vector<8x8x32xf32> to vector<8x1x8x32xf32>
    tpu.vector_store %arg5[%c0_39, %c1_40, %c0_41, %c0_42], %127 {strides = array<i32>} : memref<8x2x8x32xf32, #tpu.memory_space<vmem>>, vector<8x1x8x32xf32>,
    return
  }
  func.func @transform_0(%arg0: i32) -> (i32, i32) {
    %c0_i32 = arith.constant 0 : i32
    %c0_i32_0 = arith.constant 0 : i32
    return %arg0, %c0_i32 : i32, i32
  }
  func.func @transform_1(%arg0: i32) -> (i32, i32, i32) {
    %c0_i32 = arith.constant 0 : i32
    %c0_i32_0 = arith.constant 0 : i32
    %c0_i32_1 = arith.constant 0 : i32
    %c0_i32_2 = arith.constant 0 : i32
    return %c0_i32, %c0_i32_0, %c0_i32_1 : i32, i32, i32
  }
  func.func @transform_2(%arg0: i32) -> (i32, i32) {
    %c0_i32 = arith.constant 0 : i32
    %c0_i32_0 = arith.constant 0 : i32
    %c0_i32_1 = arith.constant 0 : i32
    return %c0_i32, %c0_i32_0 : i32, i32
  }
  func.func @transform_3(%arg0: i32) -> (i32, i32) {
    %c0_i32 = arith.constant 0 : i32
    %c0_i32_0 = arith.constant 0 : i32
    %c0_i32_1 = arith.constant 0 : i32
    return %c0_i32, %c0_i32_0 : i32, i32
  }
  func.func @transform_4(%arg0: i32) -> (i32, i32, i32, i32) {
    %c0_i32 = arith.constant 0 : i32
    %c0_i32_0 = arith.constant 0 : i32
    %c0_i32_1 = arith.constant 0 : i32
    %c0_i32_2 = arith.constant 0 : i32
    return %arg0, %c0_i32, %c0_i32_0, %c0_i32_1 : i32, i32, i32, i32
  }
}

</mosaic_0001>

<llo_original>
// kernel: tpu_custom_call.1
$region0: #{tpu_custom_call.1}
  #allocation0 [shape = 'u32[]', space=smem, size = 0x4, offset = 0x4, fixed_abs, tag = 'smem constant byte address 0x4 - core index']
  #allocation1 [shape = 'u32[144,128]{1,0:T(1,128)}', space=vmem, size = 0x12000, scoped, tag = 'internal scratch']
  %s0 = inlined_call_operand.vmem [shape: f32[128,32], index: 0, kind: input, shape index: {}]
  %s1 = inlined_call_operand.vmem [shape: f32[2,32,32], index: 1, kind: input, shape index: {}]
  %s2 = inlined_call_operand.vmem [shape: f32[1,32], index: 2, kind: input, shape index: {}]
  %s3 = inlined_call_operand.vmem [shape: f32[1,32], index: 3, kind: input, shape index: {}]
  %s4 = inlined_call_operand.hbm [shape: f32[16,2,8,32], index: 4, kind: output, shape index: {}]
  %s5 = sld [smem:[#allocation0]]
  $region49: #{tpu_custom_call.1} parent=0
    _
  %s7 = ssub.s32 1, %s5
  %s8 = scalar_select 0, %s7, %s5
  $region1: #{tpu_custom_call.1} parent=0
    #allocation2 [shape = 'u8[131072]{0}', space=vmem, size = 0x20000, scoped, tag = 'output window, operand 0']
    #allocation3 [shape = 's32[2]{0}', space=sflag, size = 0x8, scoped, tag = 'scoped memory for tpu_custom_call.1']
    %9 = vsyncpa [#allocation3], 0
    %s10 = scalar_lea.sflag [#allocation3], 1
    %11 = vsyncpa %s10, 0
    loop: start=0, step=1, limit=4
    $region2: #{tpu_custom_call.1} parent=1 // loop_pre_header
      _
    $region3: #{tpu_custom_call.1} parent=1 // loop_header
      %s13 = sphi 0, %s17
      %p14 = scmp.ge.s32.totalorder %s13, 4
      %s23 = sphi 0, %s25
      %s26 = sphi 0, %s23
      %s27 = sphi 0, %s26
      %s43 = sphi 0, %s27
      %s47 = sphi 0, %s47
      %s49 = sphi 0, %s47
      %s50 = sphi 0, %s49
      %s64 = sphi 0, %s50
      %s68 = sphi 0, %s68
      %s70 = sphi 0, %s68
      %s71 = sphi 0, %s70
      %s85 = sphi 0, %s71
      %s89 = sphi 0, %s89
      %s91 = sphi 0, %s89
      %s92 = sphi 0, %s91
      %s106 = sphi 0, %s92
      %s112 = sphi 0, %s114
      %s115 = sphi 0, %s112
      %s116 = sphi 0, %s115
      %s132 = sphi 0, %s116
    $region4: #{tpu_custom_call.1} parent=1 // loop_header_branch
      %16 = sbr.rel (%p14) target = $region8
    $region5: #{tpu_custom_call.1} parent=1 // loop_body
      %s18 = ssub.s32 %s13, 1
      %s19 = ssub.s32 %s13, 2
      %s20 = sadd.s32 %s13, 1
      %s21 = ssub.s32 %s13, %s20
      %p22 = scmp.eq.s32.totalorder %s21, 0
      %s24 = sadd.s32 %s23, 1
      %s25 = scalar_select %p22, %s23, %s24
      %p28 = pneg %p22
      %p29 = scmp.eq.s32.totalorder %s13, 1
      %p30 = por %p28, %p29
      %p31 = scmp.ne.s32.totalorder %s23, %s26
      %p32 = scmp.eq.s32.totalorder %s13, 0
      %p33 = por %p31, %p32
      %p34 = scmp.ne.s32.totalorder %s23, %s26
      %p35 = scmp.eq.s32.totalorder %s18, 1
      %p36 = por %p34, %p35
      %p37 = scmp.ne.s32.totalorder %s26, %s27
      %p38 = scmp.eq.s32.totalorder %s18, 0
      %p39 = por %p37, %p38
      %p40 = scmp.ne.s32.totalorder %s26, %s27
      %p41 = scmp.eq.s32.totalorder %s19, 1
      %p42 = por %p40, %p41
      %p44 = scmp.ne.s32.totalorder %s27, %s43
      %p45 = scmp.eq.s32.totalorder %s19, 0
      %p46 = por %p44, %p45
      %s48 = sadd.s32 %s47, 1
      %p51 = scmp.eq.s32.totalorder %s13, 1
      %p52 = scmp.ne.s32.totalorder %s47, %s49
      %p53 = scmp.eq.s32.totalorder %s13, 0
      %p54 = por %p52, %p53
      %p55 = scmp.ne.s32.totalorder %s47, %s49
      %p56 = scmp.eq.s32.totalorder %s18, 1
      %p57 = por %p55, %p56
      %p58 = scmp.ne.s32.totalorder %s49, %s50
      %p59 = scmp.eq.s32.totalorder %s18, 0
      %p60 = por %p58, %p59
      %p61 = scmp.ne.s32.totalorder %s49, %s50
      %p62 = scmp.eq.s32.totalorder %s19, 1
      %p63 = por %p61, %p62
      %p65 = scmp.ne.s32.totalorder %s50, %s64
      %p66 = scmp.eq.s32.totalorder %s19, 0
      %p67 = por %p65, %p66
      %s69 = sadd.s32 %s68, 1
      %p72 = scmp.eq.s32.totalorder %s13, 1
      %p73 = scmp.ne.s32.totalorder %s68, %s70
      %p74 = scmp.eq.s32.totalorder %s13, 0
      %p75 = por %p73, %p74
      %p76 = scmp.ne.s32.totalorder %s68, %s70
      %p77 = scmp.eq.s32.totalorder %s18, 1
      %p78 = por %p76, %p77
      %p79 = scmp.ne.s32.totalorder %s70, %s71
      %p80 = scmp.eq.s32.totalorder %s18, 0
      %p81 = por %p79, %p80
      %p82 = scmp.ne.s32.totalorder %s70, %s71
      %p83 = scmp.eq.s32.totalorder %s19, 1
      %p84 = por %p82, %p83
      %p86 = scmp.ne.s32.totalorder %s71, %s85
      %p87 = scmp.eq.s32.totalorder %s19, 0
      %p88 = por %p86, %p87
      %s90 = sadd.s32 %s89, 1
      %p93 = scmp.eq.s32.totalorder %s13, 1
      %p94 = scmp.ne.s32.totalorder %s89, %s91
      %p95 = scmp.eq.s32.totalorder %s13, 0
      %p96 = por %p94, %p95
      %p97 = scmp.ne.s32.totalorder %s89, %s91
      %p98 = scmp.eq.s32.totalorder %s18, 1
      %p99 = por %p97, %p98
      %p100 = scmp.ne.s32.totalorder %s91, %s92
      %p101 = scmp.eq.s32.totalorder %s18, 0
      %p102 = por %p100, %p101
      %p103 = scmp.ne.s32.totalorder %s91, %s92
      %p104 = scmp.eq.s32.totalorder %s19, 1
      %p105 = por %p103, %p104
      %p107 = scmp.ne.s32.totalorder %s92, %s106
      %p108 = scmp.eq.s32.totalorder %s19, 0
      %p109 = por %p107, %p108
      %s110 = ssub.s32 %s13, %s20
      %p111 = scmp.eq.s32.totalorder %s110, 0
      %s113 = sadd.s32 %s112, 1
      %s114 = scalar_select %p111, %s112, %s113
      %p117 = pneg %p111
      %p118 = scmp.eq.s32.totalorder %s13, 1
      %p119 = por %p117, %p118
      %p120 = scmp.ne.s32.totalorder %s112, %s115
      %p121 = scmp.eq.s32.totalorder %s13, 0
      %p122 = por %p120, %p121
      %p123 = scmp.ne.s32.totalorder %s112, %s115
      %p124 = scmp.eq.s32.totalorder %s18, 1
      %p125 = por %p123, %p124
      %p126 = scmp.ne.s32.totalorder %s115, %s116
      %p127 = scmp.eq.s32.totalorder %s18, 0
      %p128 = por %p126, %p127
      %p129 = scmp.ne.s32.totalorder %s115, %s116
      %p130 = scmp.eq.s32.totalorder %s19, 1
      %p131 = por %p129, %p130
      %p133 = scmp.ne.s32.totalorder %s116, %s132
      %p134 = scmp.eq.s32.totalorder %s19, 0
      %p135 = por %p133, %p134
      %p136 = scmp.le.s32.totalorder 1, %s13
      %p137 = scmp.lt.s32.totalorder %s13, 3
      %p138 = pnand %p136, %p137
      %p139 = pneg %p138
      // Predicated region
      $region9: #{tpu_custom_call.1} parent=5 // pred_check
        _
      $region10: #{tpu_custom_call.1} parent=5 // pred_check_branch
        %141 = sbr.rel (%p138) target = $region12
      $region11: #{tpu_custom_call.1} parent=5 // pred_region
        %s142 = ssub.s32 %s13, 1
        // Predicated region
        $region13: #{tpu_custom_call.1} parent=11 // pred_check
          %p143 = pneg %p60
        $region14: #{tpu_custom_call.1} parent=11 // pred_check_branch
          %145 = sbr.rel (%p143) target = $region16
        $region15: #{tpu_custom_call.1} parent=11 // pred_region
          _
        $region16: #{tpu_custom_call.1} parent=11 // pred_fallthru
          _
        // Predicated region
        $region17: #{tpu_custom_call.1} parent=11 // pred_check
          %p146 = pneg %p81
        $region18: #{tpu_custom_call.1} parent=11 // pred_check_branch
          %148 = sbr.rel (%p146) target = $region20
        $region19: #{tpu_custom_call.1} parent=11 // pred_region
          _
        $region20: #{tpu_custom_call.1} parent=11 // pred_fallthru
          _
        // Predicated region
        $region21: #{tpu_custom_call.1} parent=11 // pred_check
          %p149 = pneg %p102
        $region22: #{tpu_custom_call.1} parent=11 // pred_check_branch
          %151 = sbr.rel (%p149) target = $region24
        $region23: #{tpu_custom_call.1} parent=11 // pred_region
          _
        $region24: #{tpu_custom_call.1} parent=11 // pred_fallthru
          _
      $region12: #{tpu_custom_call.1} parent=5 // pred_fallthru
        _
      %p152 = scmp.lt.s32.totalorder %s13, 2
      // Predicated region
      $region25: #{tpu_custom_call.1} parent=5 // pred_check
        %p153 = pneg %p152
      $region26: #{tpu_custom_call.1} parent=5 // pred_check_branch
        %155 = sbr.rel (%p153) target = $region28
      $region27: #{tpu_custom_call.1} parent=5 // pred_region
        // Predicated region
        $region29: #{tpu_custom_call.1} parent=27 // pred_check
          %p156 = pneg %p33
        $region30: #{tpu_custom_call.1} parent=27 // pred_check_branch
          %158 = sbr.rel (%p156) target = $region32
        $region31: #{tpu_custom_call.1} parent=27 // pred_region
          %s159 = smul.u32 8, %s13
          %p160 = scmp.lt.s32.totalorder %s159, 15
          %s161 = scalar_select %p160, %s159, 15
          %s162 = smul.addr %s161, 8
          %s163 = scalar_lea.vmem %s0, %s162
          %s164 = smul.u32 8, %s13
        $region32: #{tpu_custom_call.1} parent=27 // pred_fallthru
          _
      $region28: #{tpu_custom_call.1} parent=5 // pred_fallthru
        _
      %p165 = scmp.le.s32.totalorder 1, %s13
      %p166 = scmp.lt.s32.totalorder %s13, 3
      %p167 = pnand %p165, %p166
      %p168 = pneg %p167
      // Predicated region
      $region33: #{tpu_custom_call.1} parent=5 // pred_check
        _
      $region34: #{tpu_custom_call.1} parent=5 // pred_check_branch
        %170 = sbr.rel (%p167) target = $region36
      $region35: #{tpu_custom_call.1} parent=5 // pred_region
        %s171 = ssub.s32 %s13, 1
        %s172 = smul.u32 8, %s18
        %p173 = scmp.lt.s32.totalorder %s172, 15
        %s174 = scalar_select %p173, %s172, 15
        %s175 = smul.addr %s174, 8
        %s176 = scalar_lea.vmem %s0, %s175
        %p177 = pneg %p39
        %p178 = pneg %p36
        %p179 = pneg %p60
        %p180 = pneg %p57
        %p181 = pneg %p81
        %p182 = pneg %p78
        %p183 = pneg %p102
        %p184 = pneg %p99
        %p185 = pneg %p128
        %p186 = pneg %p125
        %s187 = sand.u32 %s115, 1
        %s188 = scalar_lea.sflag [#allocation3], %s187
        %s189 = sand.u32 %s115, 1
        %s190 = smul.addr %s189, 128
        %s191 = scalar_lea.vmem [#allocation2], %s190
        %s192 = smul.u32 8, %s18
        %p193 = scmp.lt.s32.totalorder %s192, 15
        %s194 = scalar_select %p193, %s192, 15
        %s195 = smul.addr %s194, 8
        %s196 = scalar_lea.vmem %s0, %s195
        %s197 = smul.u32 8, %s18
        %s198 = smul.u32 8, %s18
        %v199 = vld [vmem:[%s196] sm:$0xff]
        %v200 = vld [vmem:[%s196 + $0x8] sm:$0xff]
        %v201 = vld [vmem:[%s196 + $0x10] sm:$0xff]
        %v202 = vld [vmem:[%s196 + $0x18] sm:$0xff]
        %v203 = vld [vmem:[%s196 + $0x20] sm:$0xff]
        %v204 = vld [vmem:[%s196 + $0x28] sm:$0xff]
        %v205 = vld [vmem:[%s196 + $0x30] sm:$0xff]
        %v206 = vld [vmem:[%s196 + $0x38] sm:$0xff]
        %v207 = vld [vmem:[%s2] sm:$0x1]
        %v208 = vld [vmem:[%s3] sm:$0x1]
        %v209 = vlaneseq
        %v210 = vand.u32 %v209, 127
        %vm211 = vcmp.lt.s32.totalorder %v210, 16
        %v212 = vld [vmem:[%s1] sm:$0xff]
        %v213 = vld [vmem:[%s1 + $0x8] sm:$0xff]
        %v214 = vld [vmem:[%s1 + $0x10] sm:$0xff]
        %v215 = vld [vmem:[%s1 + $0x18] sm:$0xff]
        %vm216 = vcmask 261120
        %v218 = vsel %vm216, %v199, 0
        %v221 = vsel %vm216, %v200, 0
        %v224 = vsel %vm216, %v201, 0
        %v227 = vsel %vm216, %v202, 0
        %v230 = vsel %vm216, %v203, 0
        %v233 = vsel %vm216, %v204, 0
        %v236 = vsel %vm216, %v205, 0
        %v239 = vsel %vm216, %v206, 0
        %241 = vmatprep.subr.mxu0 0.0
        %242 = vmatpush1.msra.mxu0 0.0
        %243 = vmatprep.subr.mxu0 0.0
        %244 = vmatpush1.msra.mxu0 0.0
        %245 = vmatprep.subr.mxu0 0.0
        %246 = vmatpush1.msra.mxu0 0.0
        %247 = vmatprep.subr.mxu0 0.0
        %248 = vmatpush1.msra.mxu0 0.0
        %249 = vmatprep.subr.mxu0 0.0
        %250 = vmatpush1.msra.mxu0 0.0
        %251 = vmatprep.subr.mxu0 0.0
        %252 = vmatpush1.msra.mxu0 0.0
        %253 = vmatprep.subr.mxu0 0.0
        %254 = vmatpush1.msra.mxu0 0.0
        %255 = vmatprep.subr.mxu0 0.0
        %256 = vmatpush1.msra.mxu0 0.0
        %257 = vmatprep.subr.mxu0 0.0
        %258 = vmatpush1.msra.mxu0 0.0
        %259 = vmatprep.subr.mxu0 0.0
        %260 = vmatpush1.msra.mxu0 0.0
        %261 = vmatprep.subr.mxu0 0.0
        %262 = vmatpush1.msra.mxu0 0.0
        %263 = vmatprep.subr.mxu0 0.0
        %264 = vmatpush1.msra.mxu0 0.0
        %265 = vmatprep.subr.mxu0 0.0
        %266 = vmatpush1.msra.mxu0 %v215
        %267 = vmatprep.subr.mxu0 0.0
        %268 = vmatpush1.msra.mxu0 %v214
        %269 = vmatprep.subr.mxu0 0.0
        %270 = vmatpush1.msra.mxu0 %v213
        %271 = vmatprep.subr.mxu0 0.0
        %272 = vmatpush1.msra.mxu0 %v212
        %273 = vmatprep.subr.mxu0 0.0
        %274 = vmatpush2.msra.mxu0 0.0
        %275 = vmatprep.subr.mxu0 0.0
        %276 = vmatpush2.msra.mxu0 0.0
        %277 = vmatprep.subr.mxu0 0.0
        %278 = vmatpush2.msra.mxu0 0.0
        %279 = vmatprep.subr.mxu0 0.0
        %280 = vmatpush2.msra.mxu0 0.0
        %281 = vmatprep.subr.mxu0 0.0
        %282 = vmatpush2.msra.mxu0 0.0
        %283 = vmatprep.subr.mxu0 0.0
        %284 = vmatpush2.msra.mxu0 0.0
        %285 = vmatprep.subr.mxu0 0.0
        %286 = vmatpush2.msra.mxu0 0.0
        %287 = vmatprep.subr.mxu0 0.0
        %288 = vmatpush2.msra.mxu0 0.0
        %289 = vmatprep.subr.mxu0 0.0
        %290 = vmatpush2.msra.mxu0 0.0
        %291 = vmatprep.subr.mxu0 0.0
        %292 = vmatpush2.msra.mxu0 0.0
        %293 = vmatprep.subr.mxu0 0.0
        %294 = vmatpush2.msra.mxu0 0.0
        %295 = vmatprep.subr.mxu0 0.0
        %296 = vmatpush2.msra.mxu0 0.0
        %297 = vmatprep.subr.mxu0 0.0
        %298 = vmatpush2.msra.mxu0 0.0
        %299 = vmatprep.subr.mxu0 0.0
        %300 = vmatpush2.msra.mxu0 0.0
        %301 = vmatprep.subr.mxu0 0.0
        %302 = vmatpush2.msra.mxu0 0.0
        %303 = vmatprep.subr.mxu0 0.0
        %304 = vmatpush2.msra.mxu0 0.0
        %305 = vmatprep.mubr.f32.mxu0 0.0
        %306 = vmatmul.mubr.f32.gmra.mxu0 %v218
        %v307 = vpop.f32.mrf.mxu0
        %v308 = vadd.f32 0.0, %v307
        %v309 = vpop.f32.mrf.mxu0
        %310 = vmatprep.mubr.f32.mxu0 0.0
        %311 = vmatmul.mubr.f32.gmra.mxu0 %v221
        %v312 = vpop.f32.mrf.mxu0
        %v313 = vadd.f32 0.0, %v312
        %v314 = vpop.f32.mrf.mxu0
        %315 = vmatprep.mubr.f32.mxu0 0.0
        %316 = vmatmul.mubr.f32.gmra.mxu0 %v224
        %v317 = vpop.f32.mrf.mxu0
        %v318 = vadd.f32 0.0, %v317
        %v319 = vpop.f32.mrf.mxu0
        %320 = vmatprep.mubr.f32.mxu0 0.0
        %321 = vmatmul.mubr.f32.gmra.mxu0 %v227
        %v322 = vpop.f32.mrf.mxu0
        %v323 = vadd.f32 0.0, %v322
        %v324 = vpop.f32.mrf.mxu0
        %325 = vmatprep.mubr.f32.mxu0 0.0
        %326 = vmatmul.mubr.f32.gmra.mxu0 %v230
        %v327 = vpop.f32.mrf.mxu0
        %v328 = vadd.f32 0.0, %v327
        %v329 = vpop.f32.mrf.mxu0
        %330 = vmatprep.mubr.f32.mxu0 0.0
        %331 = vmatmul.mubr.f32.gmra.mxu0 %v233
        %v332 = vpop.f32.mrf.mxu0
        %v333 = vadd.f32 0.0, %v332
        %v334 = vpop.f32.mrf.mxu0
        %335 = vmatprep.mubr.f32.mxu0 0.0
        %336 = vmatmul.mubr.f32.gmra.mxu0 %v236
        %v337 = vpop.f32.mrf.mxu0
        %v338 = vadd.f32 0.0, %v337
        %v339 = vpop.f32.mrf.mxu0
        %340 = vmatprep.mubr.f32.mxu0 0.0
        %341 = vmatmul.mubr.f32.gmra.mxu0 %v239
        %v342 = vpop.f32.mrf.mxu0
        %v343 = vadd.f32 0.0, %v342
        %v344 = vpop.f32.mrf.mxu0
        %345 = vdwg.mxu0
        %v346 = vsel %vm211, 1, 0
        %vm347 = vcmp.eq.s32.totalorder %v346, 1
        %v348 = vsel %vm347, %v308, 0.0
        %v349 = vsel %vm347, %v313, 0.0
        %v350 = vsel %vm347, %v318, 0.0
        %v351 = vsel %vm347, %v323, 0.0
        %v352 = vsel %vm347, %v328, 0.0
        %v353 = vsel %vm347, %v333, 0.0
        %v354 = vsel %vm347, %v338, 0.0
        %v355 = vsel %vm347, %v343, 0.0
        %v356 = vsel %vm216, %v348, 0.0
        %357 = vadd.xlane.f32.xlu0 %v356
        %v358 = vpop.xlane.xlu0 %357
        %v359 = vsel %vm216, %v349, 0.0
        %360 = vadd.xlane.f32.xlu0 %v359
        %v361 = vpop.xlane.xlu0 %360
        %v362 = vsel %vm216, %v350, 0.0
        %363 = vadd.xlane.f32.xlu0 %v362
        %v364 = vpop.xlane.xlu0 %363
        %v365 = vsel %vm216, %v351, 0.0
        %366 = vadd.xlane.f32.xlu0 %v365
        %v367 = vpop.xlane.xlu0 %366
        %v368 = vsel %vm216, %v352, 0.0
        %369 = vadd.xlane.f32.xlu0 %v368
        %v370 = vpop.xlane.xlu0 %369
        %v371 = vsel %vm216, %v353, 0.0
        %372 = vadd.xlane.f32.xlu0 %v371
        %v373 = vpop.xlane.xlu0 %372
        %v374 = vsel %vm216, %v354, 0.0
        %375 = vadd.xlane.f32.xlu0 %v374
        %v376 = vpop.xlane.xlu0 %375
        %v377 = vsel %vm216, %v355, 0.0
        %378 = vadd.xlane.f32.xlu0 %v377
        %v379 = vpop.xlane.xlu0 %378
        %v380 = vsel %vm216, %v308, 0.0
        %381 = vadd.xlane.f32.xlu0 %v380
        %v382 = vpop.xlane.xlu0 %381
        %v383 = vsel %vm216, %v313, 0.0
        %384 = vadd.xlane.f32.xlu0 %v383
        %v385 = vpop.xlane.xlu0 %384
        %v386 = vsel %vm216, %v318, 0.0
        %387 = vadd.xlane.f32.xlu0 %v386
        %v388 = vpop.xlane.xlu0 %387
        %v389 = vsel %vm216, %v323, 0.0
        %390 = vadd.xlane.f32.xlu0 %v389
        %v391 = vpop.xlane.xlu0 %390
        %v392 = vsel %vm216, %v328, 0.0
        %393 = vadd.xlane.f32.xlu0 %v392
        %v394 = vpop.xlane.xlu0 %393
        %v395 = vsel %vm216, %v333, 0.0
        %396 = vadd.xlane.f32.xlu0 %v395
        %v397 = vpop.xlane.xlu0 %396
        %v398 = vsel %vm216, %v338, 0.0
        %399 = vadd.xlane.f32.xlu0 %v398
        %v400 = vpop.xlane.xlu0 %399
        %v401 = vsel %vm216, %v343, 0.0
        %402 = vadd.xlane.f32.xlu0 %v401
        %v403 = vpop.xlane.xlu0 %402
        %v404 = vsub.f32 %v382, %v358
        %v405 = vsub.f32 %v385, %v361
        %v406 = vsub.f32 %v388, %v364
        %v407 = vsub.f32 %v391, %v367
        %v408 = vsub.f32 %v394, %v370
        %v409 = vsub.f32 %v397, %v373
        %v410 = vsub.f32 %v400, %v376
        %v411 = vsub.f32 %v403, %v379
        %v412 = vsel %vm347, %v358, %v404
        %v413 = vsel %vm347, %v361, %v405
        %v414 = vsel %vm347, %v364, %v406
        %v415 = vsel %vm347, %v367, %v407
        %v416 = vsel %vm347, %v370, %v408
        %v417 = vsel %vm347, %v373, %v409
        %v418 = vsel %vm347, %v376, %v410
        %v419 = vsel %vm347, %v379, %v411
        %v420 = vmul.f32 %v412, 0.0625
        %v421 = vmul.f32 %v413, 0.0625
        %v422 = vmul.f32 %v414, 0.0625
        %v423 = vmul.f32 %v415, 0.0625
        %v424 = vmul.f32 %v416, 0.0625
        %v425 = vmul.f32 %v417, 0.0625
        %v426 = vmul.f32 %v418, 0.0625
        %v427 = vmul.f32 %v419, 0.0625
        %v428 = vsub.f32 %v308, %v420
        %v429 = vsub.f32 %v313, %v421
        %v430 = vsub.f32 %v318, %v422
        %v431 = vsub.f32 %v323, %v423
        %v432 = vsub.f32 %v328, %v424
        %v433 = vsub.f32 %v333, %v425
        %v434 = vsub.f32 %v338, %v426
        %v435 = vsub.f32 %v343, %v427
        %v436 = vmul.f32 %v428, %v428
        %v437 = vmul.f32 %v429, %v429
        %v438 = vmul.f32 %v430, %v430
        %v439 = vmul.f32 %v431, %v431
        %v440 = vmul.f32 %v432, %v432
        %v441 = vmul.f32 %v433, %v433
        %v442 = vmul.f32 %v434, %v434
        %v443 = vmul.f32 %v435, %v435
        %v444 = vsel %vm347, %v436, 0.0
        %v445 = vsel %vm347, %v437, 0.0
        %v446 = vsel %vm347, %v438, 0.0
        %v447 = vsel %vm347, %v439, 0.0
        %v448 = vsel %vm347, %v440, 0.0
        %v449 = vsel %vm347, %v441, 0.0
        %v450 = vsel %vm347, %v442, 0.0
        %v451 = vsel %vm347, %v443, 0.0
        %v452 = vsel %vm216, %v444, 0.0
        %453 = vadd.xlane.f32.xlu0 %v452
        %v454 = vpop.xlane.xlu0 %453
        %v455 = vsel %vm216, %v445, 0.0
        %456 = vadd.xlane.f32.xlu0 %v455
        %v457 = vpop.xlane.xlu0 %456
        %v458 = vsel %vm216, %v446, 0.0
        %459 = vadd.xlane.f32.xlu0 %v458
        %v460 = vpop.xlane.xlu0 %459
        %v461 = vsel %vm216, %v447, 0.0
        %462 = vadd.xlane.f32.xlu0 %v461
        %v463 = vpop.xlane.xlu0 %462
        %v464 = vsel %vm216, %v448, 0.0
        %465 = vadd.xlane.f32.xlu0 %v464
        %v466 = vpop.xlane.xlu0 %465
        %v467 = vsel %vm216, %v449, 0.0
        %468 = vadd.xlane.f32.xlu0 %v467
        %v469 = vpop.xlane.xlu0 %468
        %v470 = vsel %vm216, %v450, 0.0
        %471 = vadd.xlane.f32.xlu0 %v470
        %v472 = vpop.xlane.xlu0 %471
        %v473 = vsel %vm216, %v451, 0.0
        %474 = vadd.xlane.f32.xlu0 %v473
        %v475 = vpop.xlane.xlu0 %474
        %v476 = vmul.f32 %v454, 0.0625
        %v477 = vmul.f32 %v457, 0.0625
        %v478 = vmul.f32 %v460, 0.0625
        %v479 = vmul.f32 %v463, 0.0625
        %v480 = vmul.f32 %v466, 0.0625
        %v481 = vmul.f32 %v469, 0.0625
        %v482 = vmul.f32 %v472, 0.0625
        %v483 = vmul.f32 %v475, 0.0625
        %v484 = vsel %vm347, 0.0, %v436
        %v485 = vsel %vm347, 0.0, %v437
        %v486 = vsel %vm347, 0.0, %v438
        %v487 = vsel %vm347, 0.0, %v439
        %v488 = vsel %vm347, 0.0, %v440
        %v489 = vsel %vm347, 0.0, %v441
        %v490 = vsel %vm347, 0.0, %v442
        %v491 = vsel %vm347, 0.0, %v443
        %v492 = vsel %vm216, %v484, 0.0
        %493 = vadd.xlane.f32.xlu0 %v492
        %v494 = vpop.xlane.xlu0 %493
        %v495 = vsel %vm216, %v485, 0.0
        %496 = vadd.xlane.f32.xlu0 %v495
        %v497 = vpop.xlane.xlu0 %496
        %v498 = vsel %vm216, %v486, 0.0
        %499 = vadd.xlane.f32.xlu0 %v498
        %v500 = vpop.xlane.xlu0 %499
        %v501 = vsel %vm216, %v487, 0.0
        %502 = vadd.xlane.f32.xlu0 %v501
        %v503 = vpop.xlane.xlu0 %502
        %v504 = vsel %vm216, %v488, 0.0
        %505 = vadd.xlane.f32.xlu0 %v504
        %v506 = vpop.xlane.xlu0 %505
        %v507 = vsel %vm216, %v489, 0.0
        %508 = vadd.xlane.f32.xlu0 %v507
        %v509 = vpop.xlane.xlu0 %508
        %v510 = vsel %vm216, %v490, 0.0
        %511 = vadd.xlane.f32.xlu0 %v510
        %v512 = vpop.xlane.xlu0 %511
        %v513 = vsel %vm216, %v491, 0.0
        %514 = vadd.xlane.f32.xlu0 %v513
        %v515 = vpop.xlane.xlu0 %514
        %v516 = vmul.f32 %v494, 0.0625
        %v517 = vmul.f32 %v497, 0.0625
        %v518 = vmul.f32 %v500, 0.0625
        %v519 = vmul.f32 %v503, 0.0625
        %v520 = vmul.f32 %v506, 0.0625
        %v521 = vmul.f32 %v509, 0.0625
        %v522 = vmul.f32 %v512, 0.0625
        %v523 = vmul.f32 %v515, 0.0625
        %v524 = vadd.f32 %v476, 1e-05
        %v525 = vadd.f32 %v477, 1e-05
        %v526 = vadd.f32 %v478, 1e-05
        %v527 = vadd.f32 %v479, 1e-05
        %v528 = vadd.f32 %v480, 1e-05
        %v529 = vadd.f32 %v481, 1e-05
        %v530 = vadd.f32 %v482, 1e-05
        %v531 = vadd.f32 %v483, 1e-05
        %v532 = vrsqrt.pop %v524
        %v533 = vrsqrt.pop %v525
        %v534 = vrsqrt.pop %v526
        %v535 = vrsqrt.pop %v527
        %v536 = vrsqrt.pop %v528
        %v537 = vrsqrt.pop %v529
        %v538 = vrsqrt.pop %v530
        %v539 = vrsqrt.pop %v531
        %v540 = vadd.f32 %v516, 1e-05
        %v541 = vadd.f32 %v517, 1e-05
        %v542 = vadd.f32 %v518, 1e-05
        %v543 = vadd.f32 %v519, 1e-05
        %v544 = vadd.f32 %v520, 1e-05
        %v545 = vadd.f32 %v521, 1e-05
        %v546 = vadd.f32 %v522, 1e-05
        %v547 = vadd.f32 %v523, 1e-05
        %v548 = vrsqrt.pop %v540
        %v549 = vrsqrt.pop %v541
        %v550 = vrsqrt.pop %v542
        %v551 = vrsqrt.pop %v543
        %v552 = vrsqrt.pop %v544
        %v553 = vrsqrt.pop %v545
        %v554 = vrsqrt.pop %v546
        %v555 = vrsqrt.pop %v547
        %v556 = vsel %vm347, %v532, %v548
        %v557 = vsel %vm347, %v533, %v549
        %v558 = vsel %vm347, %v534, %v550
        %v559 = vsel %vm347, %v535, %v551
        %v560 = vsel %vm347, %v536, %v552
        %v561 = vsel %vm347, %v537, %v553
        %v562 = vsel %vm347, %v538, %v554
        %v563 = vsel %vm347, %v539, %v555
        %v564 = vmul.f32 %v428, %v556
        %v565 = vmul.f32 %v429, %v557
        %v566 = vmul.f32 %v430, %v558
        %v567 = vmul.f32 %v431, %v559
        %v568 = vmul.f32 %v432, %v560
        %v569 = vmul.f32 %v433, %v561
        %v570 = vmul.f32 %v434, %v562
        %v571 = vmul.f32 %v435, %v563
        %v573 = vlaneseq
        %v574 = vshrl.u32 %v573, 7
        %v575 = vsub.s32 0, %v574
        %v576 = vrot.slane %v207, %v575
        %v578 = vmul.f32 %v564, %v576
        %v579 = vmul.f32 %v565, %v576
        %v580 = vmul.f32 %v566, %v576
        %v581 = vmul.f32 %v567, %v576
        %v582 = vmul.f32 %v568, %v576
        %v583 = vmul.f32 %v569, %v576
        %v584 = vmul.f32 %v570, %v576
        %v585 = vmul.f32 %v571, %v576
        %v587 = vlaneseq
        %v588 = vshrl.u32 %v587, 7
        %v589 = vsub.s32 0, %v588
        %v590 = vrot.slane %v208, %v589
        %v592 = vadd.f32 %v578, %v590
        %v593 = vadd.f32 %v579, %v590
        %v594 = vadd.f32 %v580, %v590
        %v595 = vadd.f32 %v581, %v590
        %v596 = vadd.f32 %v582, %v590
        %v597 = vadd.f32 %v583, %v590
        %v598 = vadd.f32 %v584, %v590
        %v599 = vadd.f32 %v585, %v590
        %600 = vst.msk [vmem:[%s191] sm:$0xff] %vm216, %v592
        %601 = vst.msk [vmem:[%s191 + $0x10] sm:$0xff] %vm216, %v593
        %602 = vst.msk [vmem:[%s191 + $0x20] sm:$0xff] %vm216, %v594
        %603 = vst.msk [vmem:[%s191 + $0x30] sm:$0xff] %vm216, %v595
        %604 = vst.msk [vmem:[%s191 + $0x40] sm:$0xff] %vm216, %v596
        %605 = vst.msk [vmem:[%s191 + $0x50] sm:$0xff] %vm216, %v597
        %606 = vst.msk [vmem:[%s191 + $0x60] sm:$0xff] %vm216, %v598
        %607 = vst.msk [vmem:[%s191 + $0x70] sm:$0xff] %vm216, %v599
        %s608 = scalar_lea.vmem %s1, 32
        %v609 = vld [vmem:[%s608] sm:$0xff]
        %v610 = vld [vmem:[%s608 + $0x8] sm:$0xff]
        %v611 = vld [vmem:[%s608 + $0x10] sm:$0xff]
        %v612 = vld [vmem:[%s608 + $0x18] sm:$0xff]
        %613 = vmatprep.subr.mxu0 0.0
        %614 = vmatpush1.msra.mxu0 0.0
        %615 = vmatprep.subr.mxu0 0.0
        %616 = vmatpush1.msra.mxu0 0.0
        %617 = vmatprep.subr.mxu0 0.0
        %618 = vmatpush1.msra.mxu0 0.0
        %619 = vmatprep.subr.mxu0 0.0
        %620 = vmatpush1.msra.mxu0 0.0
        %621 = vmatprep.subr.mxu0 0.0
        %622 = vmatpush1.msra.mxu0 0.0
        %623 = vmatprep.subr.mxu0 0.0
        %624 = vmatpush1.msra.mxu0 0.0
        %625 = vmatprep.subr.mxu0 0.0
        %626 = vmatpush1.msra.mxu0 0.0
        %627 = vmatprep.subr.mxu0 0.0
        %628 = vmatpush1.msra.mxu0 0.0
        %629 = vmatprep.subr.mxu0 0.0
        %630 = vmatpush1.msra.mxu0 0.0
        %631 = vmatprep.subr.mxu0 0.0
        %632 = vmatpush1.msra.mxu0 0.0
        %633 = vmatprep.subr.mxu0 0.0
        %634 = vmatpush1.msra.mxu0 0.0
        %635 = vmatprep.subr.mxu0 0.0
        %636 = vmatpush1.msra.mxu0 0.0
        %637 = vmatprep.subr.mxu0 0.0
        %638 = vmatpush1.msra.mxu0 %v612
        %639 = vmatprep.subr.mxu0 0.0
        %640 = vmatpush1.msra.mxu0 %v611
        %641 = vmatprep.subr.mxu0 0.0
        %642 = vmatpush1.msra.mxu0 %v610
        %643 = vmatprep.subr.mxu0 0.0
        %644 = vmatpush1.msra.mxu0 %v609
        %645 = vmatprep.subr.mxu0 0.0
        %646 = vmatpush2.msra.mxu0 0.0
        %647 = vmatprep.subr.mxu0 0.0
        %648 = vmatpush2.msra.mxu0 0.0
        %649 = vmatprep.subr.mxu0 0.0
        %650 = vmatpush2.msra.mxu0 0.0
        %651 = vmatprep.subr.mxu0 0.0
        %652 = vmatpush2.msra.mxu0 0.0
        %653 = vmatprep.subr.mxu0 0.0
        %654 = vmatpush2.msra.mxu0 0.0
        %655 = vmatprep.subr.mxu0 0.0
        %656 = vmatpush2.msra.mxu0 0.0
        %657 = vmatprep.subr.mxu0 0.0
        %658 = vmatpush2.msra.mxu0 0.0
        %659 = vmatprep.subr.mxu0 0.0
        %660 = vmatpush2.msra.mxu0 0.0
        %661 = vmatprep.subr.mxu0 0.0
        %662 = vmatpush2.msra.mxu0 0.0
        %663 = vmatprep.subr.mxu0 0.0
        %664 = vmatpush2.msra.mxu0 0.0
        %665 = vmatprep.subr.mxu0 0.0
        %666 = vmatpush2.msra.mxu0 0.0
        %667 = vmatprep.subr.mxu0 0.0
        %668 = vmatpush2.msra.mxu0 0.0
        %669 = vmatprep.subr.mxu0 0.0
        %670 = vmatpush2.msra.mxu0 0.0
        %671 = vmatprep.subr.mxu0 0.0
        %672 = vmatpush2.msra.mxu0 0.0
        %673 = vmatprep.subr.mxu0 0.0
        %674 = vmatpush2.msra.mxu0 0.0
        %675 = vmatprep.subr.mxu0 0.0
        %676 = vmatpush2.msra.mxu0 0.0
        %677 = vmatprep.mubr.f32.mxu0 0.0
        %678 = vmatmul.mubr.f32.gmra.mxu0 %v218
        %v679 = vpop.f32.mrf.mxu0
        %v680 = vadd.f32 0.0, %v679
        %v681 = vpop.f32.mrf.mxu0
        %682 = vmatprep.mubr.f32.mxu0 0.0
        %683 = vmatmul.mubr.f32.gmra.mxu0 %v221
        %v684 = vpop.f32.mrf.mxu0
        %v685 = vadd.f32 0.0, %v684
        %v686 = vpop.f32.mrf.mxu0
        %687 = vmatprep.mubr.f32.mxu0 0.0
        %688 = vmatmul.mubr.f32.gmra.mxu0 %v224
        %v689 = vpop.f32.mrf.mxu0
        %v690 = vadd.f32 0.0, %v689
        %v691 = vpop.f32.mrf.mxu0
        %692 = vmatprep.mubr.f32.mxu0 0.0
        %693 = vmatmul.mubr.f32.gmra.mxu0 %v227
        %v694 = vpop.f32.mrf.mxu0
        %v695 = vadd.f32 0.0, %v694
        %v696 = vpop.f32.mrf.mxu0
        %697 = vmatprep.mubr.f32.mxu0 0.0
        %698 = vmatmul.mubr.f32.gmra.mxu0 %v230
        %v699 = vpop.f32.mrf.mxu0
        %v700 = vadd.f32 0.0, %v699
        %v701 = vpop.f32.mrf.mxu0
        %702 = vmatprep.mubr.f32.mxu0 0.0
        %703 = vmatmul.mubr.f32.gmra.mxu0 %v233
        %v704 = vpop.f32.mrf.mxu0
        %v705 = vadd.f32 0.0, %v704
        %v706 = vpop.f32.mrf.mxu0
        %707 = vmatprep.mubr.f32.mxu0 0.0
        %708 = vmatmul.mubr.f32.gmra.mxu0 %v236
        %v709 = vpop.f32.mrf.mxu0
        %v710 = vadd.f32 0.0, %v709
        %v711 = vpop.f32.mrf.mxu0
        %712 = vmatprep.mubr.f32.mxu0 0.0
        %713 = vmatmul.mubr.f32.gmra.mxu0 %v239
        %v714 = vpop.f32.mrf.mxu0
        %v715 = vadd.f32 0.0, %v714
        %v716 = vpop.f32.mrf.mxu0
        %717 = vdwg.mxu0
        %v718 = vsel %vm347, %v680, 0.0
        %v719 = vsel %vm347, %v685, 0.0
        %v720 = vsel %vm347, %v690, 0.0
        %v721 = vsel %vm347, %v695, 0.0
        %v722 = vsel %vm347, %v700, 0.0
        %v723 = vsel %vm347, %v705, 0.0
        %v724 = vsel %vm347, %v710, 0.0
        %v725 = vsel %vm347, %v715, 0.0
        %v726 = vsel %vm216, %v718, 0.0
        %727 = vadd.xlane.f32.xlu0 %v726
        %v728 = vpop.xlane.xlu0 %727
        %v729 = vsel %vm216, %v719, 0.0
        %730 = vadd.xlane.f32.xlu0 %v729
        %v731 = vpop.xlane.xlu0 %730
        %v732 = vsel %vm216, %v720, 0.0
        %733 = vadd.xlane.f32.xlu0 %v732
        %v734 = vpop.xlane.xlu0 %733
        %v735 = vsel %vm216, %v721, 0.0
        %736 = vadd.xlane.f32.xlu0 %v735
        %v737 = vpop.xlane.xlu0 %736
        %v738 = vsel %vm216, %v722, 0.0
        %739 = vadd.xlane.f32.xlu0 %v738
        %v740 = vpop.xlane.xlu0 %739
        %v741 = vsel %vm216, %v723, 0.0
        %742 = vadd.xlane.f32.xlu0 %v741
        %v743 = vpop.xlane.xlu0 %742
        %v744 = vsel %vm216, %v724, 0.0
        %745 = vadd.xlane.f32.xlu0 %v744
        %v746 = vpop.xlane.xlu0 %745
        %v747 = vsel %vm216, %v725, 0.0
        %748 = vadd.xlane.f32.xlu0 %v747
        %v749 = vpop.xlane.xlu0 %748
        %v750 = vsel %vm216, %v680, 0.0
        %751 = vadd.xlane.f32.xlu0 %v750
        %v752 = vpop.xlane.xlu0 %751
        %v753 = vsel %vm216, %v685, 0.0
        %754 = vadd.xlane.f32.xlu0 %v753
        %v755 = vpop.xlane.xlu0 %754
        %v756 = vsel %vm216, %v690, 0.0
        %757 = vadd.xlane.f32.xlu0 %v756
        %v758 = vpop.xlane.xlu0 %757
        %v759 = vsel %vm216, %v695, 0.0
        %760 = vadd.xlane.f32.xlu0 %v759
        %v761 = vpop.xlane.xlu0 %760
        %v762 = vsel %vm216, %v700, 0.0
        %763 = vadd.xlane.f32.xlu0 %v762
        %v764 = vpop.xlane.xlu0 %763
        %v765 = vsel %vm216, %v705, 0.0
        %766 = vadd.xlane.f32.xlu0 %v765
        %v767 = vpop.xlane.xlu0 %766
        %v768 = vsel %vm216, %v710, 0.0
        %769 = vadd.xlane.f32.xlu0 %v768
        %v770 = vpop.xlane.xlu0 %769
        %v771 = vsel %vm216, %v715, 0.0
        %772 = vadd.xlane.f32.xlu0 %v771
        %v773 = vpop.xlane.xlu0 %772
        %v774 = vsub.f32 %v752, %v728
        %v775 = vsub.f32 %v755, %v731
        %v776 = vsub.f32 %v758, %v734
        %v777 = vsub.f32 %v761, %v737
        %v778 = vsub.f32 %v764, %v740
        %v779 = vsub.f32 %v767, %v743
        %v780 = vsub.f32 %v770, %v746
        %v781 = vsub.f32 %v773, %v749
        %v782 = vsel %vm347, %v728, %v774
        %v783 = vsel %vm347, %v731, %v775
        %v784 = vsel %vm347, %v734, %v776
        %v785 = vsel %vm347, %v737, %v777
        %v786 = vsel %vm347, %v740, %v778
        %v787 = vsel %vm347, %v743, %v779
        %v788 = vsel %vm347, %v746, %v780
        %v789 = vsel %vm347, %v749, %v781
        %v790 = vmul.f32 %v782, 0.0625
        %v791 = vmul.f32 %v783, 0.0625
        %v792 = vmul.f32 %v784, 0.0625
        %v793 = vmul.f32 %v785, 0.0625
        %v794 = vmul.f32 %v786, 0.0625
        %v795 = vmul.f32 %v787, 0.0625
        %v796 = vmul.f32 %v788, 0.0625
        %v797 = vmul.f32 %v789, 0.0625
        %v798 = vsub.f32 %v680, %v790
        %v799 = vsub.f32 %v685, %v791
        %v800 = vsub.f32 %v690, %v792
        %v801 = vsub.f32 %v695, %v793
        %v802 = vsub.f32 %v700, %v794
        %v803 = vsub.f32 %v705, %v795
        %v804 = vsub.f32 %v710, %v796
        %v805 = vsub.f32 %v715, %v797
        %v806 = vmul.f32 %v798, %v798
        %v807 = vmul.f32 %v799, %v799
        %v808 = vmul.f32 %v800, %v800
        %v809 = vmul.f32 %v801, %v801
        %v810 = vmul.f32 %v802, %v802
        %v811 = vmul.f32 %v803, %v803
        %v812 = vmul.f32 %v804, %v804
        %v813 = vmul.f32 %v805, %v805
        %v814 = vsel %vm347, %v806, 0.0
        %v815 = vsel %vm347, %v807, 0.0
        %v816 = vsel %vm347, %v808, 0.0
        %v817 = vsel %vm347, %v809, 0.0
        %v818 = vsel %vm347, %v810, 0.0
        %v819 = vsel %vm347, %v811, 0.0
        %v820 = vsel %vm347, %v812, 0.0
        %v821 = vsel %vm347, %v813, 0.0
        %v822 = vsel %vm216, %v814, 0.0
        %823 = vadd.xlane.f32.xlu0 %v822
        %v824 = vpop.xlane.xlu0 %823
        %v825 = vsel %vm216, %v815, 0.0
        %826 = vadd.xlane.f32.xlu0 %v825
        %v827 = vpop.xlane.xlu0 %826
        %v828 = vsel %vm216, %v816, 0.0
        %829 = vadd.xlane.f32.xlu0 %v828
        %v830 = vpop.xlane.xlu0 %829
        %v831 = vsel %vm216, %v817, 0.0
        %832 = vadd.xlane.f32.xlu0 %v831
        %v833 = vpop.xlane.xlu0 %832
        %v834 = vsel %vm216, %v818, 0.0
        %835 = vadd.xlane.f32.xlu0 %v834
        %v836 = vpop.xlane.xlu0 %835
        %v837 = vsel %vm216, %v819, 0.0
        %838 = vadd.xlane.f32.xlu0 %v837
        %v839 = vpop.xlane.xlu0 %838
        %v840 = vsel %vm216, %v820, 0.0
        %841 = vadd.xlane.f32.xlu0 %v840
        %v842 = vpop.xlane.xlu0 %841
        %v843 = vsel %vm216, %v821, 0.0
        %844 = vadd.xlane.f32.xlu0 %v843
        %v845 = vpop.xlane.xlu0 %844
        %v846 = vmul.f32 %v824, 0.0625
        %v847 = vmul.f32 %v827, 0.0625
        %v848 = vmul.f32 %v830, 0.0625
        %v849 = vmul.f32 %v833, 0.0625
        %v850 = vmul.f32 %v836, 0.0625
        %v851 = vmul.f32 %v839, 0.0625
        %v852 = vmul.f32 %v842, 0.0625
        %v853 = vmul.f32 %v845, 0.0625
        %v854 = vsel %vm347, 0.0, %v806
        %v855 = vsel %vm347, 0.0, %v807
        %v856 = vsel %vm347, 0.0, %v808
        %v857 = vsel %vm347, 0.0, %v809
        %v858 = vsel %vm347, 0.0, %v810
        %v859 = vsel %vm347, 0.0, %v811
        %v860 = vsel %vm347, 0.0, %v812
        %v861 = vsel %vm347, 0.0, %v813
        %v862 = vsel %vm216, %v854, 0.0
        %863 = vadd.xlane.f32.xlu0 %v862
        %v864 = vpop.xlane.xlu0 %863
        %v865 = vsel %vm216, %v855, 0.0
        %866 = vadd.xlane.f32.xlu0 %v865
        %v867 = vpop.xlane.xlu0 %866
        %v868 = vsel %vm216, %v856, 0.0
        %869 = vadd.xlane.f32.xlu0 %v868
        %v870 = vpop.xlane.xlu0 %869
        %v871 = vsel %vm216, %v857, 0.0
        %872 = vadd.xlane.f32.xlu0 %v871
        %v873 = vpop.xlane.xlu0 %872
        %v874 = vsel %vm216, %v858, 0.0
        %875 = vadd.xlane.f32.xlu0 %v874
        %v876 = vpop.xlane.xlu0 %875
        %v877 = vsel %vm216, %v859, 0.0
        %878 = vadd.xlane.f32.xlu0 %v877
        %v879 = vpop.xlane.xlu0 %878
        %v880 = vsel %vm216, %v860, 0.0
        %881 = vadd.xlane.f32.xlu0 %v880
        %v882 = vpop.xlane.xlu0 %881
        %v883 = vsel %vm216, %v861, 0.0
        %884 = vadd.xlane.f32.xlu0 %v883
        %v885 = vpop.xlane.xlu0 %884
        %v886 = vmul.f32 %v864, 0.0625
        %v887 = vmul.f32 %v867, 0.0625
        %v888 = vmul.f32 %v870, 0.0625
        %v889 = vmul.f32 %v873, 0.0625
        %v890 = vmul.f32 %v876, 0.0625
        %v891 = vmul.f32 %v879, 0.0625
        %v892 = vmul.f32 %v882, 0.0625
        %v893 = vmul.f32 %v885, 0.0625
        %v894 = vadd.f32 %v846, 1e-05
        %v895 = vadd.f32 %v847, 1e-05
        %v896 = vadd.f32 %v848, 1e-05
        %v897 = vadd.f32 %v849, 1e-05
        %v898 = vadd.f32 %v850, 1e-05
        %v899 = vadd.f32 %v851, 1e-05
        %v900 = vadd.f32 %v852, 1e-05
        %v901 = vadd.f32 %v853, 1e-05
        %v902 = vrsqrt.pop %v894
        %v903 = vrsqrt.pop %v895
        %v904 = vrsqrt.pop %v896
        %v905 = vrsqrt.pop %v897
        %v906 = vrsqrt.pop %v898
        %v907 = vrsqrt.pop %v899
        %v908 = vrsqrt.pop %v900
        %v909 = vrsqrt.pop %v901
        %v910 = vadd.f32 %v886, 1e-05
        %v911 = vadd.f32 %v887, 1e-05
        %v912 = vadd.f32 %v888, 1e-05
        %v913 = vadd.f32 %v889, 1e-05
        %v914 = vadd.f32 %v890, 1e-05
        %v915 = vadd.f32 %v891, 1e-05
        %v916 = vadd.f32 %v892, 1e-05
        %v917 = vadd.f32 %v893, 1e-05
        %v918 = vrsqrt.pop %v910
        %v919 = vrsqrt.pop %v911
        %v920 = vrsqrt.pop %v912
        %v921 = vrsqrt.pop %v913
        %v922 = vrsqrt.pop %v914
        %v923 = vrsqrt.pop %v915
        %v924 = vrsqrt.pop %v916
        %v925 = vrsqrt.pop %v917
        %v926 = vsel %vm347, %v902, %v918
        %v927 = vsel %vm347, %v903, %v919
        %v928 = vsel %vm347, %v904, %v920
        %v929 = vsel %vm347, %v905, %v921
        %v930 = vsel %vm347, %v906, %v922
        %v931 = vsel %vm347, %v907, %v923
        %v932 = vsel %vm347, %v908, %v924
        %v933 = vsel %vm347, %v909, %v925
        %v934 = vmul.f32 %v798, %v926
        %v935 = vmul.f32 %v799, %v927
        %v936 = vmul.f32 %v800, %v928
        %v937 = vmul.f32 %v801, %v929
        %v938 = vmul.f32 %v802, %v930
        %v939 = vmul.f32 %v803, %v931
        %v940 = vmul.f32 %v804, %v932
        %v941 = vmul.f32 %v805, %v933
        %v942 = vmul.f32 %v934, %v576
        %v943 = vmul.f32 %v935, %v576
        %v944 = vmul.f32 %v936, %v576
        %v945 = vmul.f32 %v937, %v576
        %v946 = vmul.f32 %v938, %v576
        %v947 = vmul.f32 %v939, %v576
        %v948 = vmul.f32 %v940, %v576
        %v949 = vmul.f32 %v941, %v576
        %v950 = vadd.f32 %v942, %v590
        %v951 = vadd.f32 %v943, %v590
        %v952 = vadd.f32 %v944, %v590
        %v953 = vadd.f32 %v945, %v590
        %v954 = vadd.f32 %v946, %v590
        %v955 = vadd.f32 %v947, %v590
        %v956 = vadd.f32 %v948, %v590
        %v957 = vadd.f32 %v949, %v590
        %s958 = scalar_lea.vmem %s191, 8 [#allocation2]
        %959 = vst.msk [vmem:[%s958] sm:$0xff] %vm216, %v950
        %960 = vst.msk [vmem:[%s958 + $0x10] sm:$0xff] %vm216, %v951
        %961 = vst.msk [vmem:[%s958 + $0x20] sm:$0xff] %vm216, %v952
        %962 = vst.msk [vmem:[%s958 + $0x30] sm:$0xff] %vm216, %v953
        %963 = vst.msk [vmem:[%s958 + $0x40] sm:$0xff] %vm216, %v954
        %964 = vst.msk [vmem:[%s958 + $0x50] sm:$0xff] %vm216, %v955
        %965 = vst.msk [vmem:[%s958 + $0x60] sm:$0xff] %vm216, %v956
        %966 = vst.msk [vmem:[%s958 + $0x70] sm:$0xff] %vm216, %v957
        %s967 = sand.u32 %s115, 1
        %s968 = scalar_lea.sflag [#allocation3], %s967
        %s969 = sand.u32 %s115, 1
        %s970 = smul.addr %s969, 128
        %s971 = scalar_lea.vmem [#allocation2], %s970
        // Predicated region
        $region37: #{tpu_custom_call.1} parent=35 // pred_check
          %p972 = pneg %p125
        $region38: #{tpu_custom_call.1} parent=35 // pred_check_branch
          %974 = sbr.rel (%p972) target = $region40
        $region39: #{tpu_custom_call.1} parent=35 // pred_region
          %s975 = smul.u32 8, %s18
          %s977 = ssub.s32 2048, 2048
          %978 = vsyncadd %s968, %s977
          %s979 = smul.addr %s975, 2
          %s980 = smul.addr %s979, 128
          %s981 = scalar_lea.hbm %s4, %s980
          %s982 = sshll.u32 %s971, 4
          %s983 = int_to_ptr.vmem [resolvable:$true] %s982
          %988 = dma.vmem_to_hbm [thread:$0]  %s983, 2048, %s981, %s968, 128, 128, 8
        $region40: #{tpu_custom_call.1} parent=35 // pred_fallthru
          _
      $region36: #{tpu_custom_call.1} parent=5 // pred_fallthru
        _
      %p989 = scmp.le.s32.totalorder 2, %s13
      // Predicated region
      $region41: #{tpu_custom_call.1} parent=5 // pred_check
        %p990 = pneg %p989
      $region42: #{tpu_custom_call.1} parent=5 // pred_check_branch
        %992 = sbr.rel (%p990) target = $region44
      $region43: #{tpu_custom_call.1} parent=5 // pred_region
        %s993 = ssub.s32 %s13, 2
        // Predicated region
        $region45: #{tpu_custom_call.1} parent=43 // pred_check
          %p994 = pneg %p131
        $region46: #{tpu_custom_call.1} parent=43 // pred_check_branch
          %996 = sbr.rel (%p994) target = $region48
        $region47: #{tpu_custom_call.1} parent=43 // pred_region
          %s997 = sand.u32 %s116, 1
          %s998 = scalar_lea.sflag [#allocation3], %s997
          %s999 = sand.u32 %s116, 1
          %s1000 = smul.addr %s999, 128
          %s1001 = scalar_lea.vmem [#allocation2], %s1000
          %1002 = dma.done %s998, 2048
        $region48: #{tpu_custom_call.1} parent=43 // pred_fallthru
          _
      $region44: #{tpu_custom_call.1} parent=5 // pred_fallthru
        _
    $region6: #{tpu_custom_call.1} parent=1 // loop_footer
      %s17 = sadd.s32 1, %s13
    $region7: #{tpu_custom_call.1} parent=1 // loop_footer_branch
      %12 = sbr.rel target = $region3
    $region8: #{tpu_custom_call.1} parent=1 // loop_exit
      _
    %1003 = vsyncpa [#allocation3], 1
    %s1004 = scalar_lea.sflag [#allocation3], 1
    %1005 = vsyncpa %s1004, 1

</llo_original>
